<compile_context>
chip_gen: v7x
topology: tpu7x:2x2x1
jax: 0.10.0
libtpu: 0.0.40
codegen_flags: <defaults>
</compile_context>

<pallas_src>
import jax
import jax.numpy as jnp
from jax.experimental import pallas as pl
from jax.experimental.pallas import tpu as pltpu


def _pe_add_kernel(x_ref, pe_ref, o_ref):
    # x_ref / o_ref block: (TB, TL); pe_ref block: (1, TL) broadcast over batch.
    x = x_ref[...].astype(jnp.float32)
    pe = pe_ref[...].astype(jnp.float32)
    o_ref[...] = (x + pe).astype(o_ref.dtype)


def _build_pe(L, D):
    """PE table, exactly mirroring the PyTorch forward (f32)."""
    even_i = jnp.arange(0, D, 2, dtype=jnp.float32)
    denominator = jnp.power(jnp.float32(10000.0), even_i / D)
    position = jnp.arange(L, dtype=jnp.float32).reshape(L, 1)
    even_pe = jnp.sin(position / denominator)
    odd_pe = jnp.cos(position / denominator)
    stacked = jnp.stack([even_pe, odd_pe], axis=2)
    pe = stacked.reshape(L, 2 * even_pe.shape[1])[:, :D]
    return pe


def _tile(dim, align, cap):
    """Tile size for one axis: the full extent when it fits the cap (always a
    legal block shape), else the largest multiple of `align` <= cap (the
    ragged tail is handled by a cdiv grid)."""
    cap = max(align, min(cap, dim))
    if dim <= cap:
        return dim
    return (cap // align) * align


def positional_encoding_add(x, *, donate_input=False):
    """x: (batch, max_length, d_model) -> x + PE (broadcast over batch).

    NOTE: the output keeps x.dtype (the add itself is done in f32)."""
    B, L, D = x.shape
    LD = L * D
    itemsize = jnp.dtype(x.dtype).itemsize

    x_flat = x.reshape(B, LD)                       # lane-dense layout

    pe = _build_pe(L, D).reshape(1, LD)             # f32, computed once
    if x.dtype != jnp.float32:
        # Bandwidth-bound kernel: match PE dtype to x to halve its traffic.
        pe = pe.astype(x.dtype)
    pe_itemsize = jnp.dtype(pe.dtype).itemsize

    # ---- tile selection --------------------------------------------------
    sub_align = max(8, 32 // itemsize)              # 8 f32 / 16 bf16 / 32 int8
    LANE_CAP = 16384                                # lanes per block
    BLOCK_BUDGET = 8 << 20                          # ~8 MiB x blocks

    TL = _tile(LD, 128, LANE_CAP)
    tb_cap = max(
        sub_align,
        (BLOCK_BUDGET // max(1, TL * itemsize)) // sub_align * sub_align,
    )
    TB = _tile(B, sub_align, tb_cap)

    # v7x has 2 TensorCores sharing HBM: for non-trivial arrays make sure at
    # least one "parallel" axis has >= 2 blocks so both cores get work.
    if (pl.cdiv(LD, TL) * pl.cdiv(B, TB) == 1) and (B * LD * itemsize > (1 << 20)):
        if LD >= 256:
            TL = max(128, (pl.cdiv(LD, 2) + 127) // 128 * 128)
        elif B >= 2 * sub_align:
            TB = max(sub_align, pl.cdiv(B, 2) // sub_align * sub_align)

    n_lane = pl.cdiv(LD, TL)
    n_batch = pl.cdiv(B, TB)
    # Batch axis innermost: the PE block index is constant across it, so the
    # (1, TL) PE tile is only DMA'd n_lane times instead of every grid step.
    grid = (n_lane, n_batch)

    blk_x = TB * TL * itemsize
    blk_pe = TL * pe_itemsize
    needed = 2 * blk_x + 2 * blk_x + 2 * blk_pe      # dbl-buffered in/out + PE
    vmem_limit = min(needed + (4 << 20), 48 << 20)   # <= 48 MiB: safe on v7x

    cost = pl.CostEstimate(
        flops=B * LD,                                     # one add per element
        transcendentals=0,                                # PE precomputed outside
        bytes_accessed=2 * B * LD * itemsize + LD * pe_itemsize,
    )

    out_flat = pl.pallas_call(
        _pe_add_kernel,
        out_shape=jax.ShapeDtypeStruct((B, LD), x.dtype),
        grid_spec=pltpu.PrefetchScalarGridSpec(
            num_scalar_prefetch=0,
            grid=grid,
            in_specs=[
                pl.BlockSpec((TB, TL), lambda j, i: (i, j)),   # x tile
                pl.BlockSpec((1, TL), lambda j, i: (0, j)),    # PE row (batch-invariant)
            ],
            out_specs=pl.BlockSpec((TB, TL), lambda j, i: (i, j)),
        ),
        compiler_params=pltpu.CompilerParams(
            dimension_semantics=("parallel", "parallel"),
            vmem_limit_bytes=int(vmem_limit),
        ),
        cost_estimate=cost,
        input_output_aliases=({0: 0} if donate_input else {}),
    )(x_flat, pe)

    return out_flat.reshape(B, L, D)


def _reference(x):
    # Pure-JAX reference mirroring the PyTorch forward exactly.
    B, L, D = x.shape
    even_i = jnp.arange(0, D, 2, dtype=jnp.float32)
    denominator = jnp.power(10000.0, even_i / D)
    position = jnp.arange(L, dtype=jnp.float32).reshape(L, 1)
    even_pe = jnp.sin(position / denominator)
    odd_pe = jnp.cos(position / denominator)
    stacked = jnp.stack([even_pe, odd_pe], axis=2)
    pe = stacked.reshape(L, -1)[:, :D]
    return x + pe


if __name__ == "__main__":
    key = jax.random.PRNGKey(0)

    # Case 1: small, nicely aligned shape.
    batch, max_length, d_model = 2, 8, 32        # module: d_model, max_length
    x = jax.random.normal(key, (batch, max_length, d_model), dtype=jnp.float32)
    out = jax.block_until_ready(positional_encoding_add(x))
    ref = _reference(x)
    assert out.shape == x.shape and out.dtype == x.dtype
    assert jnp.allclose(out, ref, atol=1e-5, rtol=1e-5)

    # Case 2: module defaults (max_length=5) with odd sizes -> full-extent blocks.
    key2 = jax.random.PRNGKey(0)
    x2 = jax.random.normal(key2, (3, 5, 20), dtype=jnp.float32)
    out2 = jax.block_until_ready(positional_encoding_add(x2))
    ref2 = _reference(x2)
    assert out2.shape == x2.shape and out2.dtype == x2.dtype
    assert jnp.allclose(out2, ref2, atol=1e-5, rtol=1e-5)

    print("KERNEL_OK")
</pallas_src>

<mosaic_0001>
module attributes {stable_mosaic.version = 11 : i64} {
  func.func @_pe_add_kernel(%arg0: i32, %arg1: i32, %arg2: memref<2x256xf32, #tpu.memory_space<vmem>>, %arg3: memref<1x256xf32, #tpu.memory_space<vmem>>, %arg4: memref<2x256xf32, #tpu.memory_space<vmem>>) attributes {dimension_semantics = [#tpu.dimension_semantics<parallel>, #tpu.dimension_semantics<parallel>], iteration_bounds = array<i64: 1, 1>, scalar_prefetch = 0 : i64, scratch_operands = 0 : i64, tpu.core_type = #tpu.core_type<tc>, window_params = [{transform_indices = @transform_0, window_bounds = array<i64: 2, 256>}, {transform_indices = @transform_1, window_bounds = array<i64: 1, 256>}, {transform_indices = @transform_2, window_bounds = array<i64: 2, 256>}]} {
    %c0 = arith.constant 0 : index
    %c0_0 = arith.constant 0 : index
    %0 = vector.load %arg2[%c0, %c0_0] : memref<2x256xf32, #tpu.memory_space<vmem>>, vector<2x256xf32>
    %c0_1 = arith.constant 0 : index
    %c0_2 = arith.constant 0 : index
    %1 = vector.load %arg3[%c0_1, %c0_2] : memref<1x256xf32, #tpu.memory_space<vmem>>, vector<1x256xf32>
    %2 = vector.broadcast %1 : vector<1x256xf32> to vector<2x256xf32>
    %3 = arith.addf %0, %2 : vector<2x256xf32>
    %c0_3 = arith.constant 0 : index
    %c0_4 = arith.constant 0 : index
    %4 = vector.load %arg4[%c0_3, %c0_4] : memref<2x256xf32, #tpu.memory_space<vmem>>, vector<2x256xf32>
    tpu.vector_store %arg4[%c0_3, %c0_4], %3 {strides = array<i32>} : memref<2x256xf32, #tpu.memory_space<vmem>>, vector<2x256xf32>,
    return
  }
  func.func @transform_0(%arg0: i32, %arg1: i32) -> (i32, i32) {
    %c0_i32 = arith.constant 0 : i32
    return %arg1, %arg0 : i32, i32
  }
  func.func @transform_1(%arg0: i32, %arg1: i32) -> (i32, i32) {
    %c0_i32 = arith.constant 0 : i32
    %c0_i32_0 = arith.constant 0 : i32
    return %c0_i32, %arg0 : i32, i32
  }
  func.func @transform_2(%arg0: i32, %arg1: i32) -> (i32, i32) {
    %c0_i32 = arith.constant 0 : i32
    return %arg1, %arg0 : i32, i32
  }
}

</mosaic_0001>

<llo_original>
// kernel: tpu_custom_call.1
$region0: #{tpu_custom_call.1}
  #allocation0 [shape = 'u32[]', space=smem, size = 0x4, offset = 0x4, fixed_abs, tag = 'smem constant byte address 0x4 - core index']
  #allocation1 [shape = 'u32[144,128]{1,0:T(1,128)}', space=vmem, size = 0x12000, scoped, tag = 'internal scratch']
  %s0 = inlined_call_operand.hbm [shape: f32[2,256], index: 0, kind: input, shape index: {}]
  %s1 = inlined_call_operand.vmem [shape: f32[1,256], index: 1, kind: input, shape index: {}]
  %s2 = inlined_call_operand.hbm [shape: f32[2,256], index: 2, kind: output, shape index: {}]
  %s3 = sld [smem:[#allocation0]]
  $region22: #{tpu_custom_call.1} parent=0
    _
  %s5 = ssub.s32 1, %s3
  %s6 = scalar_select 0, %s5, %s3
  $region1: #{tpu_custom_call.1} parent=0
    #allocation2 [shape = 'u8[2048]{0}', space=vmem, size = 0x800, scoped, tag = 'input window, operand 0, single buffered']
    #allocation3 [shape = 's32[1]{0}', space=sflag, size = 0x4, scoped, tag = 'scoped memory for tpu_custom_call.1']
    #allocation4 [shape = 's32[1]{0}', space=sflag, size = 0x4, scoped, tag = 'scoped memory for tpu_custom_call.1']
    #allocation5 [shape = 'u8[2048]{0}', space=vmem, size = 0x800, scoped, tag = 'output window, operand 0, single buffered']
    %7 = vsyncpa [#allocation3], 0
    %8 = vsyncpa [#allocation4], 0
    // Predicated region
    $region2: #{tpu_custom_call.1} parent=1 // pred_check
      _
    $region3: #{tpu_custom_call.1} parent=1 // pred_check_branch
      %10 = sbr.rel (0) target = $region5
    $region4: #{tpu_custom_call.1} parent=1 // pred_region
      %s12 = ssub.s32 64, 64
      %13 = vsyncadd [#allocation3], %s12
      %s15 = sshll.u32 [#allocation2], 4
      %s16 = int_to_ptr.vmem [resolvable:$true] %s15
      %18 = dma.hbm_to_vmem [thread:$0]  %s0, 64, %s16, [#allocation3]
    $region5: #{tpu_custom_call.1} parent=1 // pred_fallthru
      _
    // Predicated region
    $region6: #{tpu_custom_call.1} parent=1 // pred_check
      _
    $region7: #{tpu_custom_call.1} parent=1 // pred_check_branch
      %20 = sbr.rel (0) target = $region9
    $region8: #{tpu_custom_call.1} parent=1 // pred_region
      _
    $region9: #{tpu_custom_call.1} parent=1 // pred_fallthru
      _
    // Predicated region
    $region10: #{tpu_custom_call.1} parent=1 // pred_check
      _
    $region11: #{tpu_custom_call.1} parent=1 // pred_check_branch
      %22 = sbr.rel (0) target = $region13
    $region12: #{tpu_custom_call.1} parent=1 // pred_region
      %23 = dma.done [#allocation3], 64
    $region13: #{tpu_custom_call.1} parent=1 // pred_fallthru
      _
    %v24 = vld [vmem:[#allocation2] sm:$0xf]
    %v25 = vld [vmem:[%s1] sm:$0x3]
    %v27 = vlaneseq
    %v28 = vshrl.u32 %v27, 7
    %v29 = vsub.s32 0, %v28
    %v30 = vrot.slane %v25, %v29
    %v31 = vlaneseq
    %v32 = vshrl.u32 %v31, 7
    %v33 = vsub.s32 1, %v32
    %v34 = vrot.slane %v25, %v33
    %v35 = vcombine.low %v30, %v34
    %v37 = vunpack.c.l.s4 1983009808
    %v38 = vunpack.c.0.s8 %v37
    %v39 = vlaneseq
    %v40 = vshrl.u32 %v39, 7
    %v41 = vsub.s32 %v38, %v40
    %v42 = vrot.slane %v35, %v41
    %v44 = vadd.f32 %v24, %v42
    %45 = vst [vmem:[#allocation5] sm:$0xf] %v44
    // Predicated region
    $region14: #{tpu_custom_call.1} parent=1 // pred_check
      _
    $region15: #{tpu_custom_call.1} parent=1 // pred_check_branch
      %47 = sbr.rel (0) target = $region17
    $region16: #{tpu_custom_call.1} parent=1 // pred_region
      %s49 = ssub.s32 64, 64
      %50 = vsyncadd [#allocation4], %s49
      %s52 = sshll.u32 [#allocation5], 4
      %s53 = int_to_ptr.vmem [resolvable:$true] %s52
      %55 = dma.vmem_to_hbm [thread:$0]  %s53, 64, %s2, [#allocation4]
    $region17: #{tpu_custom_call.1} parent=1 // pred_fallthru
      _
    // Predicated region
    $region18: #{tpu_custom_call.1} parent=1 // pred_check
      _
    $region19: #{tpu_custom_call.1} parent=1 // pred_check_branch
      %57 = sbr.rel (0) target = $region21
    $region20: #{tpu_custom_call.1} parent=1 // pred_region
      %58 = dma.done [#allocation4], 64
    $region21: #{tpu_custom_call.1} parent=1 // pred_fallthru
      _
    %59 = vsyncpa [#allocation3], 1
    %60 = vsyncpa [#allocation4], 1

</llo_original>
